<compile_context>
chip_gen: v5e
topology: v5e:2x2
jax: 0.10.0
libtpu: 0.0.40
codegen_flags: <defaults>
</compile_context>

<pallas_src>
import jax
import jax.numpy as jnp
from jax.experimental import pallas as pl
from jax.experimental.pallas import tpu as pltpu


K_IN = 28 * 28          # 784 logical input features
K_PAD = 896             # 7 * 128, lane-aligned contraction dim
H = 128                 # hidden width (already lane-aligned)
N_OUT = 10              # logical output classes
N_PAD = 128             # lane-dense padded output width


def _round_up(n, m):
    return ((n + m - 1) // m) * m


def mlp_kernel(x_ref, w1_ref, b1_ref, w2_ref, b2_ref, o_ref):
    # x_ref:  (TB, 896)   bf16  VMEM (streamed per grid step)
    # w1_ref: (896, 128)  bf16  VMEM (resident across steps)
    # b1_ref: (1, 128)    f32   VMEM (resident)
    # w2_ref: (128, 128)  bf16  VMEM (resident, zero-padded cols 10..127)
    # b2_ref: (1, 128)    f32   VMEM (resident, zero-padded cols 10..127)
    # o_ref:  (TB, 128)   f32   VMEM (streamed per grid step)

    # fc1 + bias + ReLU (MXU matmul, f32 accumulation; bias/ReLU on VPU)
    h = jnp.dot(x_ref[...], w1_ref[...], preferred_element_type=jnp.float32)
    h = jnp.maximum(h + b1_ref[...], 0.0)

    # fc2 (bf16 into MXU, f32 accumulation), lane-dense (TB, 128) store
    y = jnp.dot(h.astype(jnp.bfloat16), w2_ref[...],
                preferred_element_type=jnp.float32)
    o_ref[...] = (y + b2_ref[...]).astype(o_ref.dtype)


def net_forward(x, w1, b1, w2, b2, *, tb=512):
    """x: (..., 28, 28) or (B, 784) float32. Returns (B, 10) float32."""
    x2d = x.reshape(-1, K_IN).astype(jnp.float32)     # glue: x.view(-1, 784)
    B = x2d.shape[0]

    # Batch tile: at least 128 rows per step (MXU efficiency), at most `tb`.
    TB = min(tb, _round_up(B, 128))
    B_pad = _round_up(B, TB)
    num_tiles = B_pad // TB

    # --- glue: pad + cast (zeros in padded rows/cols keep the math exact) ---
    x_p = jnp.zeros((B_pad, K_PAD), jnp.bfloat16)
    x_p = x_p.at[:B, :K_IN].set(x2d.astype(jnp.bfloat16))

    w1_p = jnp.zeros((K_PAD, H), jnp.bfloat16)
    w1_p = w1_p.at[:K_IN, :].set(w1.astype(jnp.bfloat16))
    b1_p = b1.reshape(1, H).astype(jnp.float32)

    w2_p = jnp.zeros((H, N_PAD), jnp.bfloat16)
    w2_p = w2_p.at[:, :N_OUT].set(w2.astype(jnp.bfloat16))
    b2_p = jnp.zeros((1, N_PAD), jnp.float32)
    b2_p = b2_p.at[:, :N_OUT].set(b2.reshape(1, N_OUT))

    out_pad = pl.pallas_call(
        mlp_kernel,
        out_shape=jax.ShapeDtypeStruct((B_pad, N_PAD), jnp.float32),
        grid_spec=pltpu.PrefetchScalarGridSpec(
            num_scalar_prefetch=0,
            grid=(num_tiles,),
            in_specs=[
                # activations: streamed batch tiles
                pl.BlockSpec((TB, K_PAD), lambda i: (i, 0)),
                # weights / biases: same block every step -> VMEM-resident
                pl.BlockSpec((K_PAD, H), lambda i: (0, 0)),
                pl.BlockSpec((1, H), lambda i: (0, 0)),
                pl.BlockSpec((H, N_PAD), lambda i: (0, 0)),
                pl.BlockSpec((1, N_PAD), lambda i: (0, 0)),
            ],
            out_specs=pl.BlockSpec((TB, N_PAD), lambda i: (i, 0)),
        ),
        compiler_params=pltpu.CompilerParams(
            dimension_semantics=("parallel",),   # shard batch tiles across TCs
        ),
    )(x_p, w1_p, b1_p, w2_p, b2_p)

    # glue: strip batch padding and lane padding
    return out_pad[:B, :N_OUT]


def init_params(key):
    """Deterministic params matching nn.Linear(784,128) / nn.Linear(128,10).

    Stored as (in, out) so the kernel computes x @ W + b.
    """
    k1, k2, k3, k4 = jax.random.split(key, 4)
    # Uniform(-1/sqrt(fan_in), 1/sqrt(fan_in)), same scheme as PyTorch default.
    lim1 = 1.0 / jnp.sqrt(784.0)
    lim2 = 1.0 / jnp.sqrt(128.0)
    w1 = jax.random.uniform(k1, (K_IN, H), jnp.float32, -lim1, lim1)
    b1 = jax.random.uniform(k2, (1, H), jnp.float32, -lim1, lim1)
    w2 = jax.random.uniform(k3, (H, N_OUT), jnp.float32, -lim2, lim2)
    b2 = jax.random.uniform(k4, (1, N_OUT), jnp.float32, -lim2, lim2)
    return w1, b1, w2, b2


if __name__ == "__main__":
    key = jax.random.PRNGKey(0)
    k_x, k_p = jax.random.split(key)

    B = 8
    x = jax.random.normal(k_x, (B, 1, 28, 28), jnp.float32)  # MNIST-like NCHW
    w1, b1, w2, b2 = init_params(k_p)

    out = net_forward(x, w1, b1, w2, b2)
    out = jax.block_until_ready(out)
    assert out.shape == (B, N_OUT)

    # Reference in plain JAX with the same bf16 input quantization the kernel
    # applies (f32 accumulation), so tolerances stay tight.
    x2d = x.reshape(-1, K_IN)
    xb = x2d.astype(jnp.bfloat16).astype(jnp.float32)
    w1b = w1.astype(jnp.bfloat16).astype(jnp.float32)
    w2b = w2.astype(jnp.bfloat16).astype(jnp.float32)
    h_ref = jnp.maximum(xb @ w1b + b1, 0.0)
    ref = h_ref.astype(jnp.bfloat16).astype(jnp.float32) @ w2b + b2
    assert jnp.allclose(out, ref, atol=2e-2, rtol=2e-2)

    # Looser sanity check against the pure-f32 reference (bf16 rounding only).
    ref_f32 = jnp.maximum(x2d @ w1 + b1, 0.0) @ w2 + b2
    assert jnp.allclose(out, ref_f32, atol=1e-1, rtol=1e-1)

    print("KERNEL_OK")
</pallas_src>

<mosaic_0001>
module attributes {stable_mosaic.version = 11 : i64} {
  func.func @mlp_kernel(%arg0: i32, %arg1: memref<128x896xbf16, #tpu.memory_space<vmem>>, %arg2: memref<896x128xbf16, #tpu.memory_space<vmem>>, %arg3: memref<1x128xf32, #tpu.memory_space<vmem>>, %arg4: memref<128x128xbf16, #tpu.memory_space<vmem>>, %arg5: memref<1x128xf32, #tpu.memory_space<vmem>>, %arg6: memref<128x128xf32, #tpu.memory_space<vmem>>) attributes {dimension_semantics = [#tpu.dimension_semantics<parallel>], iteration_bounds = array<i64: 1>, scalar_prefetch = 0 : i64, scratch_operands = 0 : i64, tpu.core_type = #tpu.core_type<tc>, window_params = [{transform_indices = @transform_0, window_bounds = array<i64: 128, 896>}, {pipeline_mode = #tpu.pipeline_mode<synchronous>, transform_indices = @transform_1, window_bounds = array<i64: 896, 128>}, {pipeline_mode = #tpu.pipeline_mode<synchronous>, transform_indices = @transform_2, window_bounds = array<i64: 1, 128>}, {pipeline_mode = #tpu.pipeline_mode<synchronous>, transform_indices = @transform_3, window_bounds = array<i64: 128, 128>}, {pipeline_mode = #tpu.pipeline_mode<synchronous>, transform_indices = @transform_4, window_bounds = array<i64: 1, 128>}, {transform_indices = @transform_5, window_bounds = array<i64: 128, 128>}]} {
    %c0 = arith.constant 0 : index
    %c0_0 = arith.constant 0 : index
    %0 = vector.load %arg1[%c0, %c0_0] : memref<128x896xbf16, #tpu.memory_space<vmem>>, vector<128x896xbf16>
    %c0_1 = arith.constant 0 : index
    %c0_2 = arith.constant 0 : index
    %1 = vector.load %arg2[%c0_1, %c0_2] : memref<896x128xbf16, #tpu.memory_space<vmem>>, vector<896x128xbf16>
    %cst = arith.constant dense<0.000000e+00> : vector<128x128xf32>
    %2 = tpu.matmul %0, %1, %cst {dimension_numbers = #tpu.dot_dimension_numbers<[1], [0], [0], [1], [0, 0, 1, 1], [], []>} : vector<128x896xbf16>, vector<896x128xbf16>, vector<128x128xf32> -> vector<128x128xf32>
    %c0_3 = arith.constant 0 : index
    %c0_4 = arith.constant 0 : index
    %3 = vector.load %arg3[%c0_3, %c0_4] : memref<1x128xf32, #tpu.memory_space<vmem>>, vector<1x128xf32>
    %4 = vector.broadcast %3 : vector<1x128xf32> to vector<128x128xf32>
    %5 = arith.addf %2, %4 : vector<128x128xf32>
    %cst_5 = arith.constant 0.000000e+00 : f32
    %6 = vector.broadcast %cst_5 : f32 to vector<128x128xf32>
    %7 = arith.maximumf %5, %6 : vector<128x128xf32>
    %8 = arith.truncf %7 : vector<128x128xf32> to vector<128x128xbf16>
    %c0_6 = arith.constant 0 : index
    %c0_7 = arith.constant 0 : index
    %9 = vector.load %arg4[%c0_6, %c0_7] : memref<128x128xbf16, #tpu.memory_space<vmem>>, vector<128x128xbf16>
    %cst_8 = arith.constant dense<0.000000e+00> : vector<128x128xf32>
    %10 = tpu.matmul %8, %9, %cst_8 {dimension_numbers = #tpu.dot_dimension_numbers<[1], [0], [0], [1], [0, 0, 1, 1], [], []>} : vector<128x128xbf16>, vector<128x128xbf16>, vector<128x128xf32> -> vector<128x128xf32>
    %c0_9 = arith.constant 0 : index
    %c0_10 = arith.constant 0 : index
    %11 = vector.load %arg5[%c0_9, %c0_10] : memref<1x128xf32, #tpu.memory_space<vmem>>, vector<1x128xf32>
    %12 = vector.broadcast %11 : vector<1x128xf32> to vector<128x128xf32>
    %13 = arith.addf %10, %12 : vector<128x128xf32>
    %c0_11 = arith.constant 0 : index
    %c0_12 = arith.constant 0 : index
    %14 = vector.load %arg6[%c0_11, %c0_12] : memref<128x128xf32, #tpu.memory_space<vmem>>, vector<128x128xf32>
    tpu.vector_store %arg6[%c0_11, %c0_12], %13 {strides = array<i32>} : memref<128x128xf32, #tpu.memory_space<vmem>>, vector<128x128xf32>,
    return
  }
  func.func @transform_0(%arg0: i32) -> (i32, i32) {
    %c0_i32 = arith.constant 0 : i32
    %c0_i32_0 = arith.constant 0 : i32
    return %arg0, %c0_i32 : i32, i32
  }
  func.func @transform_1(%arg0: i32) -> (i32, i32) {
    %c0_i32 = arith.constant 0 : i32
    %c0_i32_0 = arith.constant 0 : i32
    %c0_i32_1 = arith.constant 0 : i32
    return %c0_i32, %c0_i32_0 : i32, i32
  }
  func.func @transform_2(%arg0: i32) -> (i32, i32) {
    %c0_i32 = arith.constant 0 : i32
    %c0_i32_0 = arith.constant 0 : i32
    %c0_i32_1 = arith.constant 0 : i32
    return %c0_i32, %c0_i32_0 : i32, i32
  }
  func.func @transform_3(%arg0: i32) -> (i32, i32) {
    %c0_i32 = arith.constant 0 : i32
    %c0_i32_0 = arith.constant 0 : i32
    %c0_i32_1 = arith.constant 0 : i32
    return %c0_i32, %c0_i32_0 : i32, i32
  }
  func.func @transform_4(%arg0: i32) -> (i32, i32) {
    %c0_i32 = arith.constant 0 : i32
    %c0_i32_0 = arith.constant 0 : i32
    %c0_i32_1 = arith.constant 0 : i32
    return %c0_i32, %c0_i32_0 : i32, i32
  }
  func.func @transform_5(%arg0: i32) -> (i32, i32) {
    %c0_i32 = arith.constant 0 : i32
    %c0_i32_0 = arith.constant 0 : i32
    return %arg0, %c0_i32 : i32, i32
  }
}

</mosaic_0001>

<llo_original>
// kernel: tpu_custom_call.1
$region0: #{tpu_custom_call.1}
  #allocation0 [shape = 'u32[]', space=smem, size = 0x4, offset = 0x4, fixed_abs, tag = 'smem constant byte address 0x4 - core index']
  #allocation1 [shape = 'u32[72,128]{1,0:T(1,128)}', space=vmem, size = 0x9000, scoped, tag = 'internal scratch']
  %s0 = inlined_call_operand.hbm [shape: bf16[128,896], index: 0, kind: input, shape index: {}]
  %s1 = inlined_call_operand.hbm [shape: bf16[896,128], index: 1, kind: input, shape index: {}]
  %s2 = inlined_call_operand.vmem [shape: f32[1,128], index: 2, kind: input, shape index: {}]
  %s3 = inlined_call_operand.hbm [shape: bf16[128,128], index: 3, kind: input, shape index: {}]
  %s4 = inlined_call_operand.vmem [shape: f32[1,128], index: 4, kind: input, shape index: {}]
  %s5 = inlined_call_operand.hbm [shape: f32[128,128], index: 5, kind: output, shape index: {}]
  %s6 = sld [smem:[#allocation0]]
  $region42: #{tpu_custom_call.1} parent=0
    _
  %s8 = ssub.s32 1, %s6
  %s9 = scalar_select 0, %s8, %s6
  $region1: #{tpu_custom_call.1} parent=0
    #allocation2 [shape = 'u8[229376]{0}', space=vmem, size = 0x38000, scoped, tag = 'input window, operand 0, single buffered']
    #allocation3 [shape = 's32[1]{0}', space=sflag, size = 0x4, scoped, tag = 'scoped memory for tpu_custom_call.1']
    #allocation4 [shape = 's32[1]{0}', space=sflag, size = 0x4, scoped, tag = 'scoped memory for tpu_custom_call.1']
    #allocation5 [shape = 'u8[229376]{0}', space=vmem, size = 0x38000, scoped, tag = 'input window, operand 1, single buffered']
    #allocation6 [shape = 's32[1]{0}', space=sflag, size = 0x4, scoped, tag = 'scoped memory for tpu_custom_call.1']
    #allocation7 [shape = 'u8[32768]{0}', space=vmem, size = 0x8000, scoped, tag = 'input window, operand 3, single buffered']
    #allocation8 [shape = 'u8[65536]{0}', space=vmem, size = 0x10000, scoped, tag = 'output window, operand 0, single buffered']
    %10 = vsyncpa [#allocation3], 0
    %11 = vsyncpa [#allocation6], 0
    %12 = vsyncpa [#allocation4], 0
    // Predicated region
    $region2: #{tpu_custom_call.1} parent=1 // pred_check
      _
    $region3: #{tpu_custom_call.1} parent=1 // pred_check_branch
      %14 = sbr.rel (0) target = $region5
    $region4: #{tpu_custom_call.1} parent=1 // pred_region
      %16 = vsyncadd [#allocation3], 0
      %s17 = sshll.u32 %s0, 4
      %s18 = int_to_ptr.hbm [resolvable:$true] %s17
      %s19 = sshll.u32 [#allocation2], 4
      %s20 = int_to_ptr.vmem [resolvable:$true] %s19
      %25 = dma.hbm_to_vmem [thread:$0]  %s18, 7168, %s20, [#allocation3], 448, 448, 28
    $region5: #{tpu_custom_call.1} parent=1 // pred_fallthru
      _
    // Predicated region
    $region6: #{tpu_custom_call.1} parent=1 // pred_check
      _
    $region7: #{tpu_custom_call.1} parent=1 // pred_check_branch
      %27 = sbr.rel (0) target = $region9
    $region8: #{tpu_custom_call.1} parent=1 // pred_region
      %29 = vsyncadd [#allocation6], 0
      %s30 = sshll.u32 %s1, 4
      %s31 = int_to_ptr.hbm [resolvable:$true] %s30
      %s32 = sshll.u32 [#allocation5], 4
      %s33 = int_to_ptr.vmem [resolvable:$true] %s32
      %38 = dma.hbm_to_vmem [thread:$0]  %s31, 7168, %s33, [#allocation6], 64, 64, 4
    $region9: #{tpu_custom_call.1} parent=1 // pred_fallthru
      _
    // Predicated region
    $region10: #{tpu_custom_call.1} parent=1 // pred_check
      _
    $region11: #{tpu_custom_call.1} parent=1 // pred_check_branch
      %40 = sbr.rel (0) target = $region13
    $region12: #{tpu_custom_call.1} parent=1 // pred_region
      _
    $region13: #{tpu_custom_call.1} parent=1 // pred_fallthru
      _
    // Predicated region
    $region14: #{tpu_custom_call.1} parent=1 // pred_check
      _
    $region15: #{tpu_custom_call.1} parent=1 // pred_check_branch
      %42 = sbr.rel (0) target = $region17
    $region16: #{tpu_custom_call.1} parent=1 // pred_region
      %44 = vsyncadd [#allocation6], 0
      %s45 = sshll.u32 %s3, 4
      %s46 = int_to_ptr.hbm [resolvable:$true] %s45
      %s47 = sshll.u32 [#allocation7], 4
      %s48 = int_to_ptr.vmem [resolvable:$true] %s47
      %53 = dma.hbm_to_vmem [thread:$0]  %s46, 1024, %s48, [#allocation6], 64, 64, 4
    $region17: #{tpu_custom_call.1} parent=1 // pred_fallthru
      _
    // Predicated region
    $region18: #{tpu_custom_call.1} parent=1 // pred_check
      _
    $region19: #{tpu_custom_call.1} parent=1 // pred_check_branch
      %55 = sbr.rel (0) target = $region21
    $region20: #{tpu_custom_call.1} parent=1 // pred_region
      _
    $region21: #{tpu_custom_call.1} parent=1 // pred_fallthru
      _
    // Predicated region
    $region22: #{tpu_custom_call.1} parent=1 // pred_check
      _
    $region23: #{tpu_custom_call.1} parent=1 // pred_check_branch
      %57 = sbr.rel (0) target = $region25
    $region24: #{tpu_custom_call.1} parent=1 // pred_region
      %59 = dma.done [#allocation3], 7168
    $region25: #{tpu_custom_call.1} parent=1 // pred_fallthru
      _
    // Predicated region
    $region26: #{tpu_custom_call.1} parent=1 // pred_check
      _
    $region27: #{tpu_custom_call.1} parent=1 // pred_check_branch
      %61 = sbr.rel (0) target = $region29
    $region28: #{tpu_custom_call.1} parent=1 // pred_region
      %63 = dma.done [#allocation6], 7168
    $region29: #{tpu_custom_call.1} parent=1 // pred_fallthru
      _
    // Predicated region
    $region30: #{tpu_custom_call.1} parent=1 // pred_check
      _
    $region31: #{tpu_custom_call.1} parent=1 // pred_check_branch
      %65 = sbr.rel (0) target = $region33
    $region32: #{tpu_custom_call.1} parent=1 // pred_region
      %67 = dma.done [#allocation6], 1024
    $region33: #{tpu_custom_call.1} parent=1 // pred_fallthru
      _
    %v68 = vld [vmem:[#allocation2] sm:$0xff]
    %v69 = vld [vmem:[#allocation2 + $0x8] sm:$0xff]
    %v70 = vld [vmem:[#allocation2 + $0x10] sm:$0xff]
    %v71 = vld [vmem:[#allocation2 + $0x18] sm:$0xf]
    %v72 = vld [vmem:[#allocation2 + $0x1c] sm:$0xff]
    %v73 = vld [vmem:[#allocation2 + $0x24] sm:$0xff]
    %v74 = vld [vmem:[#allocation2 + $0x2c] sm:$0xff]
    %v75 = vld [vmem:[#allocation2 + $0x34] sm:$0xf]
    %v76 = vld [vmem:[#allocation2 + $0x38] sm:$0xff]
    %v77 = vld [vmem:[#allocation2 + $0x40] sm:$0xff]
    %v78 = vld [vmem:[#allocation2 + $0x48] sm:$0xff]
    %v79 = vld [vmem:[#allocation2 + $0x50] sm:$0xf]
    %v80 = vld [vmem:[#allocation2 + $0x54] sm:$0xff]
    %v81 = vld [vmem:[#allocation2 + $0x5c] sm:$0xff]
    %v82 = vld [vmem:[#allocation2 + $0x64] sm:$0xff]
    %v83 = vld [vmem:[#allocation2 + $0x6c] sm:$0xf]
    %v84 = vld [vmem:[#allocation2 + $0x70] sm:$0xff]
    %v85 = vld [vmem:[#allocation2 + $0x78] sm:$0xff]
    %v86 = vld [vmem:[#allocation2 + $0x80] sm:$0xff]
    %v87 = vld [vmem:[#allocation2 + $0x88] sm:$0xf]
    %v88 = vld [vmem:[#allocation2 + $0x8c] sm:$0xff]
    %v89 = vld [vmem:[#allocation2 + $0x94] sm:$0xff]
    %v90 = vld [vmem:[#allocation2 + $0x9c] sm:$0xff]
    %v91 = vld [vmem:[#allocation2 + $0xa4] sm:$0xf]
    %v92 = vld [vmem:[#allocation2 + $0xa8] sm:$0xff]
    %v93 = vld [vmem:[#allocation2 + $0xb0] sm:$0xff]
    %v94 = vld [vmem:[#allocation2 + $0xb8] sm:$0xff]
    %v95 = vld [vmem:[#allocation2 + $0xc0] sm:$0xf]
    %v96 = vld [vmem:[#allocation2 + $0xc4] sm:$0xff]
    %v97 = vld [vmem:[#allocation2 + $0xcc] sm:$0xff]
    %v98 = vld [vmem:[#allocation2 + $0xd4] sm:$0xff]
    %v99 = vld [vmem:[#allocation2 + $0xdc] sm:$0xf]
    %v100 = vld [vmem:[#allocation2 + $0xe0] sm:$0xff]
    %v101 = vld [vmem:[#allocation2 + $0xe8] sm:$0xff]
    %v102 = vld [vmem:[#allocation2 + $0xf0] sm:$0xff]
    %v103 = vld [vmem:[#allocation2 + $0xf8] sm:$0xf]
    %v104 = vld [vmem:[#allocation2 + $0xfc] sm:$0xff]
    %v105 = vld [vmem:[#allocation2 + $0x104] sm:$0xff]
    %v106 = vld [vmem:[#allocation2 + $0x10c] sm:$0xff]
    %v107 = vld [vmem:[#allocation2 + $0x114] sm:$0xf]
    %v108 = vld [vmem:[#allocation2 + $0x118] sm:$0xff]
    %v109 = vld [vmem:[#allocation2 + $0x120] sm:$0xff]
    %v110 = vld [vmem:[#allocation2 + $0x128] sm:$0xff]
    %v111 = vld [vmem:[#allocation2 + $0x130] sm:$0xf]
    %v112 = vld [vmem:[#allocation2 + $0x134] sm:$0xff]
    %v113 = vld [vmem:[#allocation2 + $0x13c] sm:$0xff]
    %v114 = vld [vmem:[#allocation2 + $0x144] sm:$0xff]
    %v115 = vld [vmem:[#allocation2 + $0x14c] sm:$0xf]
    %v116 = vld [vmem:[#allocation2 + $0x150] sm:$0xff]
    %v117 = vld [vmem:[#allocation2 + $0x158] sm:$0xff]
    %v118 = vld [vmem:[#allocation2 + $0x160] sm:$0xff]
    %v119 = vld [vmem:[#allocation2 + $0x168] sm:$0xf]
    %v120 = vld [vmem:[#allocation2 + $0x16c] sm:$0xff]
    %v121 = vld [vmem:[#allocation2 + $0x174] sm:$0xff]
    %v122 = vld [vmem:[#allocation2 + $0x17c] sm:$0xff]
    %v123 = vld [vmem:[#allocation2 + $0x184] sm:$0xf]
    %v124 = vld [vmem:[#allocation2 + $0x188] sm:$0xff]
    %v125 = vld [vmem:[#allocation2 + $0x190] sm:$0xff]
    %v126 = vld [vmem:[#allocation2 + $0x198] sm:$0xff]
    %v127 = vld [vmem:[#allocation2 + $0x1a0] sm:$0xf]
    %v128 = vld [vmem:[#allocation2 + $0x1a4] sm:$0xff]
    %v129 = vld [vmem:[#allocation2 + $0x1ac] sm:$0xff]
    %v130 = vld [vmem:[#allocation2 + $0x1b4] sm:$0xff]
    %v131 = vld [vmem:[#allocation2 + $0x1bc] sm:$0xf]
    %v132 = vld [vmem:[#allocation5] sm:$0xf]
    %v133 = vld [vmem:[#allocation5 + $0x4] sm:$0xf]
    %v134 = vld [vmem:[#allocation5 + $0x8] sm:$0xf]
    %v135 = vld [vmem:[#allocation5 + $0xc] sm:$0xf]
    %v136 = vld [vmem:[#allocation5 + $0x10] sm:$0xf]
    %v137 = vld [vmem:[#allocation5 + $0x14] sm:$0xf]
    %v138 = vld [vmem:[#allocation5 + $0x18] sm:$0xf]
    %v139 = vld [vmem:[#allocation5 + $0x1c] sm:$0xf]
    %v140 = vld [vmem:[#allocation5 + $0x20] sm:$0xf]
    %v141 = vld [vmem:[#allocation5 + $0x24] sm:$0xf]
    %v142 = vld [vmem:[#allocation5 + $0x28] sm:$0xf]
    %v143 = vld [vmem:[#allocation5 + $0x2c] sm:$0xf]
    %v144 = vld [vmem:[#allocation5 + $0x30] sm:$0xf]
    %v145 = vld [vmem:[#allocation5 + $0x34] sm:$0xf]
    %v146 = vld [vmem:[#allocation5 + $0x38] sm:$0xf]
    %v147 = vld [vmem:[#allocation5 + $0x3c] sm:$0xf]
    %v148 = vld [vmem:[#allocation5 + $0x40] sm:$0xf]
    %v149 = vld [vmem:[#allocation5 + $0x44] sm:$0xf]
    %v150 = vld [vmem:[#allocation5 + $0x48] sm:$0xf]
    %v151 = vld [vmem:[#allocation5 + $0x4c] sm:$0xf]
    %v152 = vld [vmem:[#allocation5 + $0x50] sm:$0xf]
    %v153 = vld [vmem:[#allocation5 + $0x54] sm:$0xf]
    %v154 = vld [vmem:[#allocation5 + $0x58] sm:$0xf]
    %v155 = vld [vmem:[#allocation5 + $0x5c] sm:$0xf]
    %v156 = vld [vmem:[#allocation5 + $0x60] sm:$0xf]
    %v157 = vld [vmem:[#allocation5 + $0x64] sm:$0xf]
    %v158 = vld [vmem:[#allocation5 + $0x68] sm:$0xf]
    %v159 = vld [vmem:[#allocation5 + $0x6c] sm:$0xf]
    %v160 = vld [vmem:[#allocation5 + $0x70] sm:$0xf]
    %v161 = vld [vmem:[#allocation5 + $0x74] sm:$0xf]
    %v162 = vld [vmem:[#allocation5 + $0x78] sm:$0xf]
    %v163 = vld [vmem:[#allocation5 + $0x7c] sm:$0xf]
    %v164 = vld [vmem:[#allocation5 + $0x80] sm:$0xf]
    %v165 = vld [vmem:[#allocation5 + $0x84] sm:$0xf]
    %v166 = vld [vmem:[#allocation5 + $0x88] sm:$0xf]
    %v167 = vld [vmem:[#allocation5 + $0x8c] sm:$0xf]
    %v168 = vld [vmem:[#allocation5 + $0x90] sm:$0xf]
    %v169 = vld [vmem:[#allocation5 + $0x94] sm:$0xf]
    %v170 = vld [vmem:[#allocation5 + $0x98] sm:$0xf]
    %v171 = vld [vmem:[#allocation5 + $0x9c] sm:$0xf]
    %v172 = vld [vmem:[#allocation5 + $0xa0] sm:$0xf]
    %v173 = vld [vmem:[#allocation5 + $0xa4] sm:$0xf]
    %v174 = vld [vmem:[#allocation5 + $0xa8] sm:$0xf]
    %v175 = vld [vmem:[#allocation5 + $0xac] sm:$0xf]
    %v176 = vld [vmem:[#allocation5 + $0xb0] sm:$0xf]
    %v177 = vld [vmem:[#allocation5 + $0xb4] sm:$0xf]
    %v178 = vld [vmem:[#allocation5 + $0xb8] sm:$0xf]
    %v179 = vld [vmem:[#allocation5 + $0xbc] sm:$0xf]
    %v180 = vld [vmem:[#allocation5 + $0xc0] sm:$0xf]
    %v181 = vld [vmem:[#allocation5 + $0xc4] sm:$0xf]
    %v182 = vld [vmem:[#allocation5 + $0xc8] sm:$0xf]
    %v183 = vld [vmem:[#allocation5 + $0xcc] sm:$0xf]
    %v184 = vld [vmem:[#allocation5 + $0xd0] sm:$0xf]
    %v185 = vld [vmem:[#allocation5 + $0xd4] sm:$0xf]
    %v186 = vld [vmem:[#allocation5 + $0xd8] sm:$0xf]
    %v187 = vld [vmem:[#allocation5 + $0xdc] sm:$0xf]
    %v188 = vld [vmem:[#allocation5 + $0xe0] sm:$0xf]
    %v189 = vld [vmem:[#allocation5 + $0xe4] sm:$0xf]
    %v190 = vld [vmem:[#allocation5 + $0xe8] sm:$0xf]
    %v191 = vld [vmem:[#allocation5 + $0xec] sm:$0xf]
    %v192 = vld [vmem:[#allocation5 + $0xf0] sm:$0xf]
    %v193 = vld [vmem:[#allocation5 + $0xf4] sm:$0xf]
    %v194 = vld [vmem:[#allocation5 + $0xf8] sm:$0xf]
    %v195 = vld [vmem:[#allocation5 + $0xfc] sm:$0xf]
    %v196 = vld [vmem:[#allocation5 + $0x100] sm:$0xf]
    %v197 = vld [vmem:[#allocation5 + $0x104] sm:$0xf]
    %v198 = vld [vmem:[#allocation5 + $0x108] sm:$0xf]
    %v199 = vld [vmem:[#allocation5 + $0x10c] sm:$0xf]
    %v200 = vld [vmem:[#allocation5 + $0x110] sm:$0xf]
    %v201 = vld [vmem:[#allocation5 + $0x114] sm:$0xf]
    %v202 = vld [vmem:[#allocation5 + $0x118] sm:$0xf]
    %v203 = vld [vmem:[#allocation5 + $0x11c] sm:$0xf]
    %v204 = vld [vmem:[#allocation5 + $0x120] sm:$0xf]
    %v205 = vld [vmem:[#allocation5 + $0x124] sm:$0xf]
    %v206 = vld [vmem:[#allocation5 + $0x128] sm:$0xf]
    %v207 = vld [vmem:[#allocation5 + $0x12c] sm:$0xf]
    %v208 = vld [vmem:[#allocation5 + $0x130] sm:$0xf]
    %v209 = vld [vmem:[#allocation5 + $0x134] sm:$0xf]
    %v210 = vld [vmem:[#allocation5 + $0x138] sm:$0xf]
    %v211 = vld [vmem:[#allocation5 + $0x13c] sm:$0xf]
    %v212 = vld [vmem:[#allocation5 + $0x140] sm:$0xf]
    %v213 = vld [vmem:[#allocation5 + $0x144] sm:$0xf]
    %v214 = vld [vmem:[#allocation5 + $0x148] sm:$0xf]
    %v215 = vld [vmem:[#allocation5 + $0x14c] sm:$0xf]
    %v216 = vld [vmem:[#allocation5 + $0x150] sm:$0xf]
    %v217 = vld [vmem:[#allocation5 + $0x154] sm:$0xf]
    %v218 = vld [vmem:[#allocation5 + $0x158] sm:$0xf]
    %v219 = vld [vmem:[#allocation5 + $0x15c] sm:$0xf]
    %v220 = vld [vmem:[#allocation5 + $0x160] sm:$0xf]
    %v221 = vld [vmem:[#allocation5 + $0x164] sm:$0xf]
    %v222 = vld [vmem:[#allocation5 + $0x168] sm:$0xf]
    %v223 = vld [vmem:[#allocation5 + $0x16c] sm:$0xf]
    %v224 = vld [vmem:[#allocation5 + $0x170] sm:$0xf]
    %v225 = vld [vmem:[#allocation5 + $0x174] sm:$0xf]
    %v226 = vld [vmem:[#allocation5 + $0x178] sm:$0xf]
    %v227 = vld [vmem:[#allocation5 + $0x17c] sm:$0xf]
    %v228 = vld [vmem:[#allocation5 + $0x180] sm:$0xf]
    %v229 = vld [vmem:[#allocation5 + $0x184] sm:$0xf]
    %v230 = vld [vmem:[#allocation5 + $0x188] sm:$0xf]
    %v231 = vld [vmem:[#allocation5 + $0x18c] sm:$0xf]
    %v232 = vld [vmem:[#allocation5 + $0x190] sm:$0xf]
    %v233 = vld [vmem:[#allocation5 + $0x194] sm:$0xf]
    %v234 = vld [vmem:[#allocation5 + $0x198] sm:$0xf]
    %v235 = vld [vmem:[#allocation5 + $0x19c] sm:$0xf]
    %v236 = vld [vmem:[#allocation5 + $0x1a0] sm:$0xf]
    %v237 = vld [vmem:[#allocation5 + $0x1a4] sm:$0xf]
    %v238 = vld [vmem:[#allocation5 + $0x1a8] sm:$0xf]
    %v239 = vld [vmem:[#allocation5 + $0x1ac] sm:$0xf]
    %v240 = vld [vmem:[#allocation5 + $0x1b0] sm:$0xf]
    %v241 = vld [vmem:[#allocation5 + $0x1b4] sm:$0xf]
    %v242 = vld [vmem:[#allocation5 + $0x1b8] sm:$0xf]
    %v243 = vld [vmem:[#allocation5 + $0x1bc] sm:$0xf]
    %v244 = vld [vmem:[%s2] sm:$0x1]
    %v246 = vperm.slane %v244, 0
    %v312 = vunpack.c.l.b16 %v68
    %v313 = vunpack.c.h.b16 %v68
    %v314 = vunpack.c.l.b16 %v69
    %v315 = vunpack.c.h.b16 %v69
    %v316 = vunpack.c.l.b16 %v70
    %v317 = vunpack.c.h.b16 %v70
    %v318 = vunpack.c.l.b16 %v71
    %v319 = vunpack.c.l.b16 %v72
    %v320 = vunpack.c.h.b16 %v72
    %v321 = vunpack.c.l.b16 %v73
    %v322 = vunpack.c.h.b16 %v73
    %v323 = vunpack.c.l.b16 %v74
    %v324 = vunpack.c.h.b16 %v74
    %v325 = vunpack.c.l.b16 %v75
    %v326 = vunpack.c.l.b16 %v76
    %v327 = vunpack.c.h.b16 %v76
    %v328 = vunpack.c.l.b16 %v77
    %v329 = vunpack.c.h.b16 %v77
    %v330 = vunpack.c.l.b16 %v78
    %v331 = vunpack.c.h.b16 %v78
    %v332 = vunpack.c.l.b16 %v79
    %v333 = vunpack.c.l.b16 %v80
    %v334 = vunpack.c.h.b16 %v80
    %v335 = vunpack.c.l.b16 %v81
    %v336 = vunpack.c.h.b16 %v81
    %v337 = vunpack.c.l.b16 %v82
    %v338 = vunpack.c.h.b16 %v82
    %v339 = vunpack.c.l.b16 %v83
    %v340 = vunpack.c.l.b16 %v84
    %v341 = vunpack.c.h.b16 %v84
    %v342 = vunpack.c.l.b16 %v85
    %v343 = vunpack.c.h.b16 %v85
    %v344 = vunpack.c.l.b16 %v86
    %v345 = vunpack.c.h.b16 %v86
    %v346 = vunpack.c.l.b16 %v87
    %v347 = vunpack.c.l.b16 %v88
    %v348 = vunpack.c.h.b16 %v88
    %v349 = vunpack.c.l.b16 %v89
    %v350 = vunpack.c.h.b16 %v89
    %v351 = vunpack.c.l.b16 %v90
    %v352 = vunpack.c.h.b16 %v90
    %v353 = vunpack.c.l.b16 %v91
    %v354 = vunpack.c.l.b16 %v92
    %v355 = vunpack.c.h.b16 %v92
    %v356 = vunpack.c.l.b16 %v93
    %v357 = vunpack.c.h.b16 %v93
    %v358 = vunpack.c.l.b16 %v94
    %v359 = vunpack.c.h.b16 %v94
    %v360 = vunpack.c.l.b16 %v95
    %v361 = vunpack.c.l.b16 %v96
    %v362 = vunpack.c.h.b16 %v96
    %v363 = vunpack.c.l.b16 %v97
    %v364 = vunpack.c.h.b16 %v97
    %v365 = vunpack.c.l.b16 %v98
    %v366 = vunpack.c.h.b16 %v98
    %v367 = vunpack.c.l.b16 %v99
    %v368 = vunpack.c.l.b16 %v100
    %v369 = vunpack.c.h.b16 %v100
    %v370 = vunpack.c.l.b16 %v101
    %v371 = vunpack.c.h.b16 %v101
    %v372 = vunpack.c.l.b16 %v102
    %v373 = vunpack.c.h.b16 %v102
    %v374 = vunpack.c.l.b16 %v103
    %v375 = vunpack.c.l.b16 %v104
    %v376 = vunpack.c.h.b16 %v104
    %v377 = vunpack.c.l.b16 %v105
    %v378 = vunpack.c.h.b16 %v105
    %v379 = vunpack.c.l.b16 %v106
    %v380 = vunpack.c.h.b16 %v106
    %v381 = vunpack.c.l.b16 %v107
    %v382 = vunpack.c.l.b16 %v108
    %v383 = vunpack.c.h.b16 %v108
    %v384 = vunpack.c.l.b16 %v109
    %v385 = vunpack.c.h.b16 %v109
    %v386 = vunpack.c.l.b16 %v110
    %v387 = vunpack.c.h.b16 %v110
    %v388 = vunpack.c.l.b16 %v111
    %v389 = vunpack.c.l.b16 %v112
    %v390 = vunpack.c.h.b16 %v112
    %v391 = vunpack.c.l.b16 %v113
    %v392 = vunpack.c.h.b16 %v113
    %v393 = vunpack.c.l.b16 %v114
    %v394 = vunpack.c.h.b16 %v114
    %v395 = vunpack.c.l.b16 %v115
    %v396 = vunpack.c.l.b16 %v116
    %v397 = vunpack.c.h.b16 %v116
    %v398 = vunpack.c.l.b16 %v117
    %v399 = vunpack.c.h.b16 %v117
    %v400 = vunpack.c.l.b16 %v118
    %v401 = vunpack.c.h.b16 %v118
    %v402 = vunpack.c.l.b16 %v119
    %v403 = vunpack.c.l.b16 %v120
    %v404 = vunpack.c.h.b16 %v120
    %v405 = vunpack.c.l.b16 %v121
    %v406 = vunpack.c.h.b16 %v121
    %v407 = vunpack.c.l.b16 %v122
    %v408 = vunpack.c.h.b16 %v122
    %v409 = vunpack.c.l.b16 %v123
    %v410 = vunpack.c.l.b16 %v124
    %v411 = vunpack.c.h.b16 %v124
    %v412 = vunpack.c.l.b16 %v125
    %v413 = vunpack.c.h.b16 %v125
    %v414 = vunpack.c.l.b16 %v126
    %v415 = vunpack.c.h.b16 %v126
    %v416 = vunpack.c.l.b16 %v127
    %v417 = vunpack.c.l.b16 %v128
    %v418 = vunpack.c.h.b16 %v128
    %v419 = vunpack.c.l.b16 %v129
    %v420 = vunpack.c.h.b16 %v129
    %v421 = vunpack.c.l.b16 %v130
    %v422 = vunpack.c.h.b16 %v130
    %v423 = vunpack.c.l.b16 %v131
    %v424 = vpack.c.b16 %v319, %v312
    %v425 = vpack.c.b16 %v320, %v313
    %v426 = vpack.c.b16 %v321, %v314
    %v427 = vpack.c.b16 %v322, %v315
    %v428 = vpack.c.b16 %v323, %v316
    %v429 = vpack.c.b16 %v324, %v317
    %v430 = vpack.c.b16 %v325, %v318
    %v431 = vpack.c.b16 %v333, %v326
    %v432 = vpack.c.b16 %v334, %v327
    %v433 = vpack.c.b16 %v335, %v328
    %v434 = vpack.c.b16 %v336, %v329
    %v435 = vpack.c.b16 %v337, %v330
    %v436 = vpack.c.b16 %v338, %v331
    %v437 = vpack.c.b16 %v339, %v332
    %v438 = vpack.c.b16 %v347, %v340
    %v439 = vpack.c.b16 %v348, %v341
    %v440 = vpack.c.b16 %v349, %v342
    %v441 = vpack.c.b16 %v350, %v343
    %v442 = vpack.c.b16 %v351, %v344
    %v443 = vpack.c.b16 %v352, %v345
    %v444 = vpack.c.b16 %v353, %v346
    %v445 = vpack.c.b16 %v361, %v354
    %v446 = vpack.c.b16 %v362, %v355
    %v447 = vpack.c.b16 %v363, %v356
    %v448 = vpack.c.b16 %v364, %v357
    %v449 = vpack.c.b16 %v365, %v358
    %v450 = vpack.c.b16 %v366, %v359
    %v451 = vpack.c.b16 %v367, %v360
    %v452 = vpack.c.b16 %v375, %v368
    %v453 = vpack.c.b16 %v376, %v369
    %v454 = vpack.c.b16 %v377, %v370
    %v455 = vpack.c.b16 %v378, %v371
    %v456 = vpack.c.b16 %v379, %v372
    %v457 = vpack.c.b16 %v380, %v373
    %v458 = vpack.c.b16 %v381, %v374
    %v459 = vpack.c.b16 %v389, %v382
    %v460 = vpack.c.b16 %v390, %v383
    %v461 = vpack.c.b16 %v391, %v384
    %v462 = vpack.c.b16 %v392, %v385
    %v463 = vpack.c.b16 %v393, %v386
    %v464 = vpack.c.b16 %v394, %v387
    %v465 = vpack.c.b16 %v395, %v388
    %v466 = vpack.c.b16 %v403, %v396
    %v467 = vpack.c.b16 %v404, %v397
    %v468 = vpack.c.b16 %v405, %v398
    %v469 = vpack.c.b16 %v406, %v399
    %v470 = vpack.c.b16 %v407, %v400
    %v471 = vpack.c.b16 %v408, %v401
    %v472 = vpack.c.b16 %v409, %v402
    %v473 = vpack.c.b16 %v417, %v410
    %v474 = vpack.c.b16 %v418, %v411
    %v475 = vpack.c.b16 %v419, %v412
    %v476 = vpack.c.b16 %v420, %v413
    %v477 = vpack.c.b16 %v421, %v414
    %v478 = vpack.c.b16 %v422, %v415
    %v479 = vpack.c.b16 %v423, %v416
    %v648 = vunpack.c.l.b16 %v132
    %v649 = vunpack.c.l.b16 %v133
    %v650 = vunpack.c.l.b16 %v134
    %v651 = vunpack.c.l.b16 %v135
    %v652 = vunpack.c.l.b16 %v136
    %v653 = vunpack.c.l.b16 %v137
    %v654 = vunpack.c.l.b16 %v138
    %v655 = vunpack.c.l.b16 %v139
    %v656 = vunpack.c.l.b16 %v140
    %v657 = vunpack.c.l.b16 %v141
    %v658 = vunpack.c.l.b16 %v142
    %v659 = vunpack.c.l.b16 %v143
    %v660 = vunpack.c.l.b16 %v144
    %v661 = vunpack.c.l.b16 %v145
    %v662 = vunpack.c.l.b16 %v146
    %v663 = vunpack.c.l.b16 %v147
    %v664 = vunpack.c.l.b16 %v148
    %v665 = vunpack.c.l.b16 %v149
    %v666 = vunpack.c.l.b16 %v150
    %v667 = vunpack.c.l.b16 %v151
    %v668 = vunpack.c.l.b16 %v152
    %v669 = vunpack.c.l.b16 %v153
    %v670 = vunpack.c.l.b16 %v154
    %v671 = vunpack.c.l.b16 %v155
    %v672 = vunpack.c.l.b16 %v156
    %v673 = vunpack.c.l.b16 %v157
    %v674 = vunpack.c.l.b16 %v158
    %v675 = vunpack.c.l.b16 %v159
    %v676 = vunpack.c.l.b16 %v160
    %v677 = vunpack.c.l.b16 %v161
    %v678 = vunpack.c.l.b16 %v162
    %v679 = vunpack.c.l.b16 %v163
    %v680 = vunpack.c.l.b16 %v164
    %v681 = vunpack.c.l.b16 %v165
    %v682 = vunpack.c.l.b16 %v166
    %v683 = vunpack.c.l.b16 %v167
    %v684 = vunpack.c.l.b16 %v168
    %v685 = vunpack.c.l.b16 %v169
    %v686 = vunpack.c.l.b16 %v170
    %v687 = vunpack.c.l.b16 %v171
    %v688 = vunpack.c.l.b16 %v172
    %v689 = vunpack.c.l.b16 %v173
    %v690 = vunpack.c.l.b16 %v174
    %v691 = vunpack.c.l.b16 %v175
    %v692 = vunpack.c.l.b16 %v176
    %v693 = vunpack.c.l.b16 %v177
    %v694 = vunpack.c.l.b16 %v178
    %v695 = vunpack.c.l.b16 %v179
    %v696 = vunpack.c.l.b16 %v180
    %v697 = vunpack.c.l.b16 %v181
    %v698 = vunpack.c.l.b16 %v182
    %v699 = vunpack.c.l.b16 %v183
    %v700 = vunpack.c.l.b16 %v184
    %v701 = vunpack.c.l.b16 %v185
    %v702 = vunpack.c.l.b16 %v186
    %v703 = vunpack.c.l.b16 %v187
    %v704 = vunpack.c.l.b16 %v188
    %v705 = vunpack.c.l.b16 %v189
    %v706 = vunpack.c.l.b16 %v190
    %v707 = vunpack.c.l.b16 %v191
    %v708 = vunpack.c.l.b16 %v192
    %v709 = vunpack.c.l.b16 %v193
    %v710 = vunpack.c.l.b16 %v194
    %v711 = vunpack.c.l.b16 %v195
    %v712 = vunpack.c.l.b16 %v196
    %v713 = vunpack.c.l.b16 %v197
    %v714 = vunpack.c.l.b16 %v198
    %v715 = vunpack.c.l.b16 %v199
    %v716 = vunpack.c.l.b16 %v200
    %v717 = vunpack.c.l.b16 %v201
    %v718 = vunpack.c.l.b16 %v202
    %v719 = vunpack.c.l.b16 %v203
    %v720 = vunpack.c.l.b16 %v204
    %v721 = vunpack.c.l.b16 %v205
    %v722 = vunpack.c.l.b16 %v206
    %v723 = vunpack.c.l.b16 %v207
    %v724 = vunpack.c.l.b16 %v208
    %v725 = vunpack.c.l.b16 %v209
    %v726 = vunpack.c.l.b16 %v210
    %v727 = vunpack.c.l.b16 %v211
    %v728 = vunpack.c.l.b16 %v212
    %v729 = vunpack.c.l.b16 %v213
    %v730 = vunpack.c.l.b16 %v214
    %v731 = vunpack.c.l.b16 %v215
    %v732 = vunpack.c.l.b16 %v216
    %v733 = vunpack.c.l.b16 %v217
    %v734 = vunpack.c.l.b16 %v218
    %v735 = vunpack.c.l.b16 %v219
    %v736 = vunpack.c.l.b16 %v220
    %v737 = vunpack.c.l.b16 %v221
    %v738 = vunpack.c.l.b16 %v222
    %v739 = vunpack.c.l.b16 %v223
    %v740 = vunpack.c.l.b16 %v224
    %v741 = vunpack.c.l.b16 %v225
    %v742 = vunpack.c.l.b16 %v226
    %v743 = vunpack.c.l.b16 %v227
    %v744 = vunpack.c.l.b16 %v228
    %v745 = vunpack.c.l.b16 %v229
    %v746 = vunpack.c.l.b16 %v230
    %v747 = vunpack.c.l.b16 %v231
    %v748 = vunpack.c.l.b16 %v232
    %v749 = vunpack.c.l.b16 %v233
    %v750 = vunpack.c.l.b16 %v234
    %v751 = vunpack.c.l.b16 %v235
    %v752 = vunpack.c.l.b16 %v236
    %v753 = vunpack.c.l.b16 %v237
    %v754 = vunpack.c.l.b16 %v238
    %v755 = vunpack.c.l.b16 %v239
    %v756 = vunpack.c.l.b16 %v240
    %v757 = vunpack.c.l.b16 %v241
    %v758 = vunpack.c.l.b16 %v242
    %v759 = vunpack.c.l.b16 %v243
    %v760 = vpack.c.b16 %v649, %v648
    %v761 = vpack.c.b16 %v651, %v650
    %v762 = vpack.c.b16 %v653, %v652
    %v763 = vpack.c.b16 %v655, %v654
    %v764 = vpack.c.b16 %v657, %v656
    %v765 = vpack.c.b16 %v659, %v658
    %v766 = vpack.c.b16 %v661, %v660
    %v767 = vpack.c.b16 %v663, %v662
    %v768 = vpack.c.b16 %v665, %v664
    %v769 = vpack.c.b16 %v667, %v666
    %v770 = vpack.c.b16 %v669, %v668
    %v771 = vpack.c.b16 %v671, %v670
    %v772 = vpack.c.b16 %v673, %v672
    %v773 = vpack.c.b16 %v675, %v674
    %v774 = vpack.c.b16 %v677, %v676
    %v775 = vpack.c.b16 %v679, %v678
    %v776 = vpack.c.b16 %v681, %v680
    %v777 = vpack.c.b16 %v683, %v682
    %v778 = vpack.c.b16 %v685, %v684
    %v779 = vpack.c.b16 %v687, %v686
    %v780 = vpack.c.b16 %v689, %v688
    %v781 = vpack.c.b16 %v691, %v690
    %v782 = vpack.c.b16 %v693, %v692
    %v783 = vpack.c.b16 %v695, %v694
    %v784 = vpack.c.b16 %v697, %v696
    %v785 = vpack.c.b16 %v699, %v698
    %v786 = vpack.c.b16 %v701, %v700
    %v787 = vpack.c.b16 %v703, %v702
    %v788 = vpack.c.b16 %v705, %v704
    %v789 = vpack.c.b16 %v707, %v706
    %v790 = vpack.c.b16 %v709, %v708
    %v791 = vpack.c.b16 %v711, %v710
    %v792 = vpack.c.b16 %v713, %v712
    %v793 = vpack.c.b16 %v715, %v714
    %v794 = vpack.c.b16 %v717, %v716
    %v795 = vpack.c.b16 %v719, %v718
    %v796 = vpack.c.b16 %v721, %v720
    %v797 = vpack.c.b16 %v723, %v722
    %v798 = vpack.c.b16 %v725, %v724
    %v799 = vpack.c.b16 %v727, %v726
    %v800 = vpack.c.b16 %v729, %v728
    %v801 = vpack.c.b16 %v731, %v730
    %v802 = vpack.c.b16 %v733, %v732
    %v803 = vpack.c.b16 %v735, %v734
    %v804 = vpack.c.b16 %v737, %v736
    %v805 = vpack.c.b16 %v739, %v738
    %v806 = vpack.c.b16 %v741, %v740
    %v807 = vpack.c.b16 %v743, %v742
    %v808 = vpack.c.b16 %v745, %v744
    %v809 = vpack.c.b16 %v747, %v746
    %v810 = vpack.c.b16 %v749, %v748
    %v811 = vpack.c.b16 %v751, %v750
    %v812 = vpack.c.b16 %v753, %v752
    %v813 = vpack.c.b16 %v755, %v754
    %v814 = vpack.c.b16 %v757, %v756
    %v815 = vpack.c.b16 %v759, %v758
    %872 = vmatpush.bf16.msra.mxu0 %v767
    %873 = vmatpush.bf16.msra.mxu0 %v766
    %874 = vmatpush.bf16.msra.mxu0 %v765
    %875 = vmatpush.bf16.msra.mxu0 %v764
    %876 = vmatpush.bf16.msra.mxu0 %v763
    %877 = vmatpush.bf16.msra.mxu0 %v762
    %878 = vmatpush.bf16.msra.mxu0 %v761
    %879 = vmatpush.bf16.msra.mxu0 %v760
    %880 = vmatmul.bf16.gmra.mxu0 %v424
    %v881 = vpop.f32.mrf.mxu0
    %v882 = vadd.f32 %v246, %v881
    %v883 = vpop.f32.mrf.mxu0
    %v884 = vadd.f32 %v246, %v883
    %885 = vmatmul.bf16.gmra.mxu0 %v431
    %v886 = vpop.f32.mrf.mxu0
    %v887 = vadd.f32 %v246, %v886
    %v888 = vpop.f32.mrf.mxu0
    %v889 = vadd.f32 %v246, %v888
    %890 = vmatmul.bf16.gmra.mxu0 %v438
    %v891 = vpop.f32.mrf.mxu0
    %v892 = vadd.f32 %v246, %v891
    %v893 = vpop.f32.mrf.mxu0
    %v894 = vadd.f32 %v246, %v893
    %895 = vmatmul.bf16.gmra.mxu0 %v445
    %v896 = vpop.f32.mrf.mxu0
    %v897 = vadd.f32 %v246, %v896
    %v898 = vpop.f32.mrf.mxu0
    %v899 = vadd.f32 %v246, %v898
    %900 = vmatmul.bf16.gmra.mxu0 %v452
    %v901 = vpop.f32.mrf.mxu0
    %v902 = vadd.f32 %v246, %v901
    %v903 = vpop.f32.mrf.mxu0
    %v904 = vadd.f32 %v246, %v903
    %905 = vmatmul.bf16.gmra.mxu0 %v459
    %v906 = vpop.f32.mrf.mxu0
    %v907 = vadd.f32 %v246, %v906
    %v908 = vpop.f32.mrf.mxu0
    %v909 = vadd.f32 %v246, %v908
    %910 = vmatmul.bf16.gmra.mxu0 %v466
    %v911 = vpop.f32.mrf.mxu0
    %v912 = vadd.f32 %v246, %v911
    %v913 = vpop.f32.mrf.mxu0
    %v914 = vadd.f32 %v246, %v913
    %915 = vmatmul.bf16.gmra.mxu0 %v473
    %v916 = vpop.f32.mrf.mxu0
    %v917 = vadd.f32 %v246, %v916
    %v918 = vpop.f32.mrf.mxu0
    %v919 = vadd.f32 %v246, %v918
    %920 = vdwg.mxu0
    %921 = vmatpush.bf16.msra.mxu0 %v775
    %922 = vmatpush.bf16.msra.mxu0 %v774
    %923 = vmatpush.bf16.msra.mxu0 %v773
    %924 = vmatpush.bf16.msra.mxu0 %v772
    %925 = vmatpush.bf16.msra.mxu0 %v771
    %926 = vmatpush.bf16.msra.mxu0 %v770
    %927 = vmatpush.bf16.msra.mxu0 %v769
    %928 = vmatpush.bf16.msra.mxu0 %v768
    %929 = vmatmul.bf16.gmra.mxu0 %v425
    %v930 = vpop.f32.mrf.mxu0
    %v931 = vadd.f32 %v882, %v930
    %v932 = vpop.f32.mrf.mxu0
    %v933 = vadd.f32 %v884, %v932
    %934 = vmatmul.bf16.gmra.mxu0 %v432
    %v935 = vpop.f32.mrf.mxu0
    %v936 = vadd.f32 %v887, %v935
    %v937 = vpop.f32.mrf.mxu0
    %v938 = vadd.f32 %v889, %v937
    %939 = vmatmul.bf16.gmra.mxu0 %v439
    %v940 = vpop.f32.mrf.mxu0
    %v941 = vadd.f32 %v892, %v940
    %v942 = vpop.f32.mrf.mxu0
    %v943 = vadd.f32 %v894, %v942
    %944 = vmatmul.bf16.gmra.mxu0 %v446
    %v945 = vpop.f32.mrf.mxu0
    %v946 = vadd.f32 %v897, %v945
    %v947 = vpop.f32.mrf.mxu0
    %v948 = vadd.f32 %v899, %v947
    %949 = vmatmul.bf16.gmra.mxu0 %v453
    %v950 = vpop.f32.mrf.mxu0
    %v951 = vadd.f32 %v902, %v950
    %v952 = vpop.f32.mrf.mxu0
    %v953 = vadd.f32 %v904, %v952
    %954 = vmatmul.bf16.gmra.mxu0 %v460
    %v955 = vpop.f32.mrf.mxu0
    %v956 = vadd.f32 %v907, %v955
    %v957 = vpop.f32.mrf.mxu0
    %v958 = vadd.f32 %v909, %v957
    %959 = vmatmul.bf16.gmra.mxu0 %v467
    %v960 = vpop.f32.mrf.mxu0
    %v961 = vadd.f32 %v912, %v960
    %v962 = vpop.f32.mrf.mxu0
    %v963 = vadd.f32 %v914, %v962
    %964 = vmatmul.bf16.gmra.mxu0 %v474
    %v965 = vpop.f32.mrf.mxu0
    %v966 = vadd.f32 %v917, %v965
    %v967 = vpop.f32.mrf.mxu0
    %v968 = vadd.f32 %v919, %v967
    %969 = vdwg.mxu0
    %970 = vmatpush.bf16.msra.mxu0 %v783
    %971 = vmatpush.bf16.msra.mxu0 %v782
    %972 = vmatpush.bf16.msra.mxu0 %v781
    %973 = vmatpush.bf16.msra.mxu0 %v780
    %974 = vmatpush.bf16.msra.mxu0 %v779
    %975 = vmatpush.bf16.msra.mxu0 %v778
    %976 = vmatpush.bf16.msra.mxu0 %v777
    %977 = vmatpush.bf16.msra.mxu0 %v776
    %978 = vmatmul.bf16.gmra.mxu0 %v426
    %v979 = vpop.f32.mrf.mxu0
    %v980 = vadd.f32 %v931, %v979
    %v981 = vpop.f32.mrf.mxu0
    %v982 = vadd.f32 %v933, %v981
    %983 = vmatmul.bf16.gmra.mxu0 %v433
    %v984 = vpop.f32.mrf.mxu0
    %v985 = vadd.f32 %v936, %v984
    %v986 = vpop.f32.mrf.mxu0
    %v987 = vadd.f32 %v938, %v986
    %988 = vmatmul.bf16.gmra.mxu0 %v440
    %v989 = vpop.f32.mrf.mxu0
    %v990 = vadd.f32 %v941, %v989
    %v991 = vpop.f32.mrf.mxu0
    %v992 = vadd.f32 %v943, %v991
    %993 = vmatmul.bf16.gmra.mxu0 %v447
    %v994 = vpop.f32.mrf.mxu0
    %v995 = vadd.f32 %v946, %v994
    %v996 = vpop.f32.mrf.mxu0
    %v997 = vadd.f32 %v948, %v996
    %998 = vmatmul.bf16.gmra.mxu0 %v454
    %v999 = vpop.f32.mrf.mxu0
    %v1000 = vadd.f32 %v951, %v999
    %v1001 = vpop.f32.mrf.mxu0
    %v1002 = vadd.f32 %v953, %v1001
    %1003 = vmatmul.bf16.gmra.mxu0 %v461
    %v1004 = vpop.f32.mrf.mxu0
    %v1005 = vadd.f32 %v956, %v1004
    %v1006 = vpop.f32.mrf.mxu0
    %v1007 = vadd.f32 %v958, %v1006
    %1008 = vmatmul.bf16.gmra.mxu0 %v468
    %v1009 = vpop.f32.mrf.mxu0
    %v1010 = vadd.f32 %v961, %v1009
    %v1011 = vpop.f32.mrf.mxu0
    %v1012 = vadd.f32 %v963, %v1011
    %1013 = vmatmul.bf16.gmra.mxu0 %v475
    %v1014 = vpop.f32.mrf.mxu0
    %v1015 = vadd.f32 %v966, %v1014
    %v1016 = vpop.f32.mrf.mxu0
    %v1017 = vadd.f32 %v968, %v1016
    %1018 = vdwg.mxu0
    %1019 = vmatpush.bf16.msra.mxu0 %v791
    %1020 = vmatpush.bf16.msra.mxu0 %v790
    %1021 = vmatpush.bf16.msra.mxu0 %v789
    %1022 = vmatpush.bf16.msra.mxu0 %v788
    %1023 = vmatpush.bf16.msra.mxu0 %v787
    %1024 = vmatpush.bf16.msra.mxu0 %v786
    %1025 = vmatpush.bf16.msra.mxu0 %v785
    %1026 = vmatpush.bf16.msra.mxu0 %v784
    %1027 = vmatmul.bf16.gmra.mxu0 %v427
    %v1028 = vpop.f32.mrf.mxu0
    %v1029 = vadd.f32 %v980, %v1028
    %v1030 = vpop.f32.mrf.mxu0
    %v1031 = vadd.f32 %v982, %v1030
    %1032 = vmatmul.bf16.gmra.mxu0 %v434
    %v1033 = vpop.f32.mrf.mxu0
    %v1034 = vadd.f32 %v985, %v1033
    %v1035 = vpop.f32.mrf.mxu0
    %v1036 = vadd.f32 %v987, %v1035
    %1037 = vmatmul.bf16.gmra.mxu0 %v441
    %v1038 = vpop.f32.mrf.mxu0
    %v1039 = vadd.f32 %v990, %v1038
    %v1040 = vpop.f32.mrf.mxu0
    %v1041 = vadd.f32 %v992, %v1040
    %1042 = vmatmul.bf16.gmra.mxu0 %v448
    %v1043 = vpop.f32.mrf.mxu0
    %v1044 = vadd.f32 %v995, %v1043
    %v1045 = vpop.f32.mrf.mxu0
    %v1046 = vadd.f32 %v997, %v1045
    %1047 = vmatmul.bf16.gmra.mxu0 %v455
    %v1048 = vpop.f32.mrf.mxu0
    %v1049 = vadd.f32 %v1000, %v1048
    %v1050 = vpop.f32.mrf.mxu0
    %v1051 = vadd.f32 %v1002, %v1050
    %1052 = vmatmul.bf16.gmra.mxu0 %v462
    %v1053 = vpop.f32.mrf.mxu0
    %v1054 = vadd.f32 %v1005, %v1053
    %v1055 = vpop.f32.mrf.mxu0
    %v1056 = vadd.f32 %v1007, %v1055
    %1057 = vmatmul.bf16.gmra.mxu0 %v469
    %v1058 = vpop.f32.mrf.mxu0
    %v1059 = vadd.f32 %v1010, %v1058
    %v1060 = vpop.f32.mrf.mxu0
    %v1061 = vadd.f32 %v1012, %v1060
    %1062 = vmatmul.bf16.gmra.mxu0 %v476
    %v1063 = vpop.f32.mrf.mxu0
    %v1064 = vadd.f32 %v1015, %v1063
    %v1065 = vpop.f32.mrf.mxu0
    %v1066 = vadd.f32 %v1017, %v1065
    %1067 = vdwg.mxu0
    %1068 = vmatpush.bf16.msra.mxu0 %v799
    %1069 = vmatpush.bf16.msra.mxu0 %v798
    %1070 = vmatpush.bf16.msra.mxu0 %v797
    %1071 = vmatpush.bf16.msra.mxu0 %v796
    %1072 = vmatpush.bf16.msra.mxu0 %v795
    %1073 = vmatpush.bf16.msra.mxu0 %v794
    %1074 = vmatpush.bf16.msra.mxu0 %v793
    %1075 = vmatpush.bf16.msra.mxu0 %v792
    %1076 = vmatmul.bf16.gmra.mxu0 %v428
    %v1077 = vpop.f32.mrf.mxu0
    %v1078 = vadd.f32 %v1029, %v1077
    %v1079 = vpop.f32.mrf.mxu0
    %v1080 = vadd.f32 %v1031, %v1079
    %1081 = vmatmul.bf16.gmra.mxu0 %v435
    %v1082 = vpop.f32.mrf.mxu0
    %v1083 = vadd.f32 %v1034, %v1082
    %v1084 = vpop.f32.mrf.mxu0
    %v1085 = vadd.f32 %v1036, %v1084
    %1086 = vmatmul.bf16.gmra.mxu0 %v442
    %v1087 = vpop.f32.mrf.mxu0
    %v1088 = vadd.f32 %v1039, %v1087
    %v1089 = vpop.f32.mrf.mxu0
    %v1090 = vadd.f32 %v1041, %v1089
    %1091 = vmatmul.bf16.gmra.mxu0 %v449
    %v1092 = vpop.f32.mrf.mxu0
    %v1093 = vadd.f32 %v1044, %v1092
    %v1094 = vpop.f32.mrf.mxu0
    %v1095 = vadd.f32 %v1046, %v1094
    %1096 = vmatmul.bf16.gmra.mxu0 %v456
    %v1097 = vpop.f32.mrf.mxu0
    %v1098 = vadd.f32 %v1049, %v1097
    %v1099 = vpop.f32.mrf.mxu0
    %v1100 = vadd.f32 %v1051, %v1099
    %1101 = vmatmul.bf16.gmra.mxu0 %v463
    %v1102 = vpop.f32.mrf.mxu0
    %v1103 = vadd.f32 %v1054, %v1102
    %v1104 = vpop.f32.mrf.mxu0
    %v1105 = vadd.f32 %v1056, %v1104
    %1106 = vmatmul.bf16.gmra.mxu0 %v470
    %v1107 = vpop.f32.mrf.mxu0
    %v1108 = vadd.f32 %v1059, %v1107
    %v1109 = vpop.f32.mrf.mxu0
    %v1110 = vadd.f32 %v1061, %v1109
    %1111 = vmatmul.bf16.gmra.mxu0 %v477
    %v1112 = vpop.f32.mrf.mxu0
    %v1113 = vadd.f32 %v1064, %v1112
    %v1114 = vpop.f32.mrf.mxu0
    %v1115 = vadd.f32 %v1066, %v1114
    %1116 = vdwg.mxu0
    %1117 = vmatpush.bf16.msra.mxu0 %v807
    %1118 = vmatpush.bf16.msra.mxu0 %v806
    %1119 = vmatpush.bf16.msra.mxu0 %v805
    %1120 = vmatpush.bf16.msra.mxu0 %v804
    %1121 = vmatpush.bf16.msra.mxu0 %v803
    %1122 = vmatpush.bf16.msra.mxu0 %v802
    %1123 = vmatpush.bf16.msra.mxu0 %v801
    %1124 = vmatpush.bf16.msra.mxu0 %v800
    %1125 = vmatmul.bf16.gmra.mxu0 %v429
    %v1126 = vpop.f32.mrf.mxu0
    %v1127 = vadd.f32 %v1078, %v1126
    %v1128 = vpop.f32.mrf.mxu0
    %v1129 = vadd.f32 %v1080, %v1128
    %1130 = vmatmul.bf16.gmra.mxu0 %v436
    %v1131 = vpop.f32.mrf.mxu0
    %v1132 = vadd.f32 %v1083, %v1131
    %v1133 = vpop.f32.mrf.mxu0
    %v1134 = vadd.f32 %v1085, %v1133
    %1135 = vmatmul.bf16.gmra.mxu0 %v443
    %v1136 = vpop.f32.mrf.mxu0
    %v1137 = vadd.f32 %v1088, %v1136
    %v1138 = vpop.f32.mrf.mxu0
    %v1139 = vadd.f32 %v1090, %v1138
    %1140 = vmatmul.bf16.gmra.mxu0 %v450
    %v1141 = vpop.f32.mrf.mxu0
    %v1142 = vadd.f32 %v1093, %v1141
    %v1143 = vpop.f32.mrf.mxu0
    %v1144 = vadd.f32 %v1095, %v1143
    %1145 = vmatmul.bf16.gmra.mxu0 %v457
    %v1146 = vpop.f32.mrf.mxu0
    %v1147 = vadd.f32 %v1098, %v1146
    %v1148 = vpop.f32.mrf.mxu0
    %v1149 = vadd.f32 %v1100, %v1148
    %1150 = vmatmul.bf16.gmra.mxu0 %v464
    %v1151 = vpop.f32.mrf.mxu0
    %v1152 = vadd.f32 %v1103, %v1151
    %v1153 = vpop.f32.mrf.mxu0
    %v1154 = vadd.f32 %v1105, %v1153
    %1155 = vmatmul.bf16.gmra.mxu0 %v471
    %v1156 = vpop.f32.mrf.mxu0
    %v1157 = vadd.f32 %v1108, %v1156
    %v1158 = vpop.f32.mrf.mxu0
    %v1159 = vadd.f32 %v1110, %v1158
    %1160 = vmatmul.bf16.gmra.mxu0 %v478
    %v1161 = vpop.f32.mrf.mxu0
    %v1162 = vadd.f32 %v1113, %v1161
    %v1163 = vpop.f32.mrf.mxu0
    %v1164 = vadd.f32 %v1115, %v1163
    %1165 = vdwg.mxu0
    %1166 = vmatpush.bf16.msra.mxu0 %v815
    %1167 = vmatpush.bf16.msra.mxu0 %v814
    %1168 = vmatpush.bf16.msra.mxu0 %v813
    %1169 = vmatpush.bf16.msra.mxu0 %v812
    %1170 = vmatpush.bf16.msra.mxu0 %v811
    %1171 = vmatpush.bf16.msra.mxu0 %v810
    %1172 = vmatpush.bf16.msra.mxu0 %v809
    %1173 = vmatpush.bf16.msra.mxu0 %v808
    %1174 = vmatmul.bf16.gmra.mxu0 %v430
    %v1175 = vpop.f32.mrf.mxu0
    %v1176 = vadd.f32 %v1127, %v1175
    %v1177 = vpop.f32.mrf.mxu0
    %v1178 = vadd.f32 %v1129, %v1177
    %1179 = vmatmul.bf16.gmra.mxu0 %v437
    %v1180 = vpop.f32.mrf.mxu0
    %v1181 = vadd.f32 %v1132, %v1180
    %v1182 = vpop.f32.mrf.mxu0
    %v1183 = vadd.f32 %v1134, %v1182
    %1184 = vmatmul.bf16.gmra.mxu0 %v444
    %v1185 = vpop.f32.mrf.mxu0
    %v1186 = vadd.f32 %v1137, %v1185
    %v1187 = vpop.f32.mrf.mxu0
    %v1188 = vadd.f32 %v1139, %v1187
    %1189 = vmatmul.bf16.gmra.mxu0 %v451
    %v1190 = vpop.f32.mrf.mxu0
    %v1191 = vadd.f32 %v1142, %v1190
    %v1192 = vpop.f32.mrf.mxu0
    %v1193 = vadd.f32 %v1144, %v1192
    %1194 = vmatmul.bf16.gmra.mxu0 %v458
    %v1195 = vpop.f32.mrf.mxu0
    %v1196 = vadd.f32 %v1147, %v1195
    %v1197 = vpop.f32.mrf.mxu0
    %v1198 = vadd.f32 %v1149, %v1197
    %1199 = vmatmul.bf16.gmra.mxu0 %v465
    %v1200 = vpop.f32.mrf.mxu0
    %v1201 = vadd.f32 %v1152, %v1200
    %v1202 = vpop.f32.mrf.mxu0
    %v1203 = vadd.f32 %v1154, %v1202
    %1204 = vmatmul.bf16.gmra.mxu0 %v472
    %v1205 = vpop.f32.mrf.mxu0
    %v1206 = vadd.f32 %v1157, %v1205
    %v1207 = vpop.f32.mrf.mxu0
    %v1208 = vadd.f32 %v1159, %v1207
    %1209 = vmatmul.bf16.gmra.mxu0 %v479
    %v1210 = vpop.f32.mrf.mxu0
    %v1211 = vadd.f32 %v1162, %v1210
    %v1212 = vpop.f32.mrf.mxu0
    %v1213 = vadd.f32 %v1164, %v1212
    %1214 = vdwg.mxu0
    %v1215 = vmax.f32 %v1176, 0.0
    %v1216 = vmax.f32 %v1178, 0.0
    %v1217 = vmax.f32 %v1181, 0.0
    %v1218 = vmax.f32 %v1183, 0.0
    %v1219 = vmax.f32 %v1186, 0.0
    %v1220 = vmax.f32 %v1188, 0.0
    %v1221 = vmax.f32 %v1191, 0.0
    %v1222 = vmax.f32 %v1193, 0.0
    %v1223 = vmax.f32 %v1196, 0.0
    %v1224 = vmax.f32 %v1198, 0.0
    %v1225 = vmax.f32 %v1201, 0.0
    %v1226 = vmax.f32 %v1203, 0.0
    %v1227 = vmax.f32 %v1206, 0.0
    %v1228 = vmax.f32 %v1208, 0.0
    %v1229 = vmax.f32 %v1211, 0.0
    %v1230 = vmax.f32 %v1213, 0.0
    %v1231 = vpack.c.bf16 %v1216, %v1215
    %v1232 = vpack.c.bf16 %v1218, %v1217
    %v1233 = vpack.c.bf16 %v1220, %v1219
    %v1234 = vpack.c.bf16 %v1222, %v1221
    %v1235 = vpack.c.bf16 %v1224, %v1223
    %v1236 = vpack.c.bf16 %v1226, %v1225
    %v1237 = vpack.c.bf16 %v1228, %v1227
    %v1238 = vpack.c.bf16 %v1230, %v1229
    %v1239 = vld [vmem:[#allocation7] sm:$0xf]
    %v1240 = vld [vmem:[#allocation7 + $0x4] sm:$0xf]
    %v1241 = vld [vmem:[#allocation7 + $0x8] sm:$0xf]
    %v1242 = vld [vmem:[#allocation7 + $0xc] sm:$0xf]
    %v1243 = vld [vmem:[#allocation7 + $0x10] sm:$0xf]
    %v1244 = vld [vmem:[#allocation7 + $0x14] sm:$0xf]
    %v1245 = vld [vmem:[#allocation7 + $0x18] sm:$0xf]
    %v1246 = vld [vmem:[#allocation7 + $0x1c] sm:$0xf]
    %v1247 = vld [vmem:[#allocation7 + $0x20] sm:$0xf]
    %v1248 = vld [vmem:[#allocation7 + $0x24] sm:$0xf]
    %v1249 = vld [vmem:[#allocation7 + $0x28] sm:$0xf]
    %v1250 = vld [vmem:[#allocation7 + $0x2c] sm:$0xf]
    %v1251 = vld [vmem:[#allocation7 + $0x30] sm:$0xf]
    %v1252 = vld [vmem:[#allocation7 + $0x34] sm:$0xf]
    %v1253 = vld [vmem:[#allocation7 + $0x38] sm:$0xf]
    %v1254 = vld [vmem:[#allocation7 + $0x3c] sm:$0xf]
    %v1255 = vld [vmem:[%s4] sm:$0x1]
    %v1257 = vperm.slane %v1255, 0
    %v1275 = vunpack.c.l.b16 %v1239
    %v1276 = vunpack.c.l.b16 %v1240
    %v1277 = vunpack.c.l.b16 %v1241
    %v1278 = vunpack.c.l.b16 %v1242
    %v1279 = vunpack.c.l.b16 %v1243
    %v1280 = vunpack.c.l.b16 %v1244
    %v1281 = vunpack.c.l.b16 %v1245
    %v1282 = vunpack.c.l.b16 %v1246
    %v1283 = vunpack.c.l.b16 %v1247
    %v1284 = vunpack.c.l.b16 %v1248
    %v1285 = vunpack.c.l.b16 %v1249
    %v1286 = vunpack.c.l.b16 %v1250
    %v1287 = vunpack.c.l.b16 %v1251
    %v1288 = vunpack.c.l.b16 %v1252
    %v1289 = vunpack.c.l.b16 %v1253
    %v1290 = vunpack.c.l.b16 %v1254
    %v1291 = vpack.c.b16 %v1276, %v1275
    %v1292 = vpack.c.b16 %v1278, %v1277
    %v1293 = vpack.c.b16 %v1280, %v1279
    %v1294 = vpack.c.b16 %v1282, %v1281
    %v1295 = vpack.c.b16 %v1284, %v1283
    %v1296 = vpack.c.b16 %v1286, %v1285
    %v1297 = vpack.c.b16 %v1288, %v1287
    %v1298 = vpack.c.b16 %v1290, %v1289
    %1307 = vmatpush.bf16.msra.mxu0 %v1298
    %1308 = vmatpush.bf16.msra.mxu0 %v1297
    %1309 = vmatpush.bf16.msra.mxu0 %v1296
    %1310 = vmatpush.bf16.msra.mxu0 %v1295
    %1311 = vmatpush.bf16.msra.mxu0 %v1294
    %1312 = vmatpush.bf16.msra.mxu0 %v1293
    %1313 = vmatpush.bf16.msra.mxu0 %v1292
    %1314 = vmatpush.bf16.msra.mxu0 %v1291
    %1315 = vmatmul.bf16.gmra.mxu0 %v1231
    %v1316 = vpop.f32.mrf.mxu0
    %v1317 = vadd.f32 %v1257, %v1316
    %v1318 = vpop.f32.mrf.mxu0
    %v1319 = vadd.f32 %v1257, %v1318
    %1320 = vmatmul.bf16.gmra.mxu0 %v1232
    %v1321 = vpop.f32.mrf.mxu0
    %v1322 = vadd.f32 %v1257, %v1321
    %v1323 = vpop.f32.mrf.mxu0
    %v1324 = vadd.f32 %v1257, %v1323
    %1325 = vmatmul.bf16.gmra.mxu0 %v1233
    %v1326 = vpop.f32.mrf.mxu0
    %v1327 = vadd.f32 %v1257, %v1326
    %v1328 = vpop.f32.mrf.mxu0
    %v1329 = vadd.f32 %v1257, %v1328
    %1330 = vmatmul.bf16.gmra.mxu0 %v1234
    %v1331 = vpop.f32.mrf.mxu0
    %v1332 = vadd.f32 %v1257, %v1331
    %v1333 = vpop.f32.mrf.mxu0
    %v1334 = vadd.f32 %v1257, %v1333
    %1335 = vmatmul.bf16.gmra.mxu0 %v1235
    %v1336 = vpop.f32.mrf.mxu0
    %v1337 = vadd.f32 %v1257, %v1336
    %v1338 = vpop.f32.mrf.mxu0
    %v1339 = vadd.f32 %v1257, %v1338
    %1340 = vmatmul.bf16.gmra.mxu0 %v1236
    %v1341 = vpop.f32.mrf.mxu0
    %v1342 = vadd.f32 %v1257, %v1341
    %v1343 = vpop.f32.mrf.mxu0
    %v1344 = vadd.f32 %v1257, %v1343
    %1345 = vmatmul.bf16.gmra.mxu0 %v1237
    %v1346 = vpop.f32.mrf.mxu0
    %v1347 = vadd.f32 %v1257, %v1346
    %v1348 = vpop.f32.mrf.mxu0
    %v1349 = vadd.f32 %v1257, %v1348
    %1350 = vmatmul.bf16.gmra.mxu0 %v1238
    %v1351 = vpop.f32.mrf.mxu0
    %v1352 = vadd.f32 %v1257, %v1351
    %v1353 = vpop.f32.mrf.mxu0
    %v1354 = vadd.f32 %v1257, %v1353
    %1355 = vdwg.mxu0
    %1356 = vst [vmem:[#allocation8] sm:$0xff] %v1317
    %1357 = vst [vmem:[#allocation8 + $0x8] sm:$0xff] %v1319
    %1358 = vst [vmem:[#allocation8 + $0x10] sm:$0xff] %v1322
    %1359 = vst [vmem:[#allocation8 + $0x18] sm:$0xff] %v1324
    %1360 = vst [vmem:[#allocation8 + $0x20] sm:$0xff] %v1327
    %1361 = vst [vmem:[#allocation8 + $0x28] sm:$0xff] %v1329
    %1362 = vst [vmem:[#allocation8 + $0x30] sm:$0xff] %v1332
    %1363 = vst [vmem:[#allocation8 + $0x38] sm:$0xff] %v1334
    %1364 = vst [vmem:[#allocation8 + $0x40] sm:$0xff] %v1337
    %1365 = vst [vmem:[#allocation8 + $0x48] sm:$0xff] %v1339
    %1366 = vst [vmem:[#allocation8 + $0x50] sm:$0xff] %v1342
    %1367 = vst [vmem:[#allocation8 + $0x58] sm:$0xff] %v1344
    %1368 = vst [vmem:[#allocation8 + $0x60] sm:$0xff] %v1347
    %1369 = vst [vmem:[#allocation8 + $0x68] sm:$0xff] %v1349
    %1370 = vst [vmem:[#allocation8 + $0x70] sm:$0xff] %v1352
    %1371 = vst [vmem:[#allocation8 + $0x78] sm:$0xff] %v1354
    // Predicated region
    $region34: #{tpu_custom_call.1} parent=1 // pred_check
      _
    $region35: #{tpu_custom_call.1} parent=1 // pred_check_branch
      %1373 = sbr.rel (0) target = $region37
    $region36: #{tpu_custom_call.1} parent=1 // pred_region
      %1375 = vsyncadd [#allocation4], 0
      %s1376 = sshll.u32 [#allocation8], 4
      %s1377 = int_to_ptr.vmem [resolvable:$true] %s1376
      %s1378 = sshll.u32 %s5, 4
      %s1379 = int_to_ptr.hbm [resolvable:$true] %s1378
      %1384 = dma.vmem_to_hbm [thread:$0]  %s1377, 2048, %s1379, [#allocation4], 128, 128, 8
    $region37: #{tpu_custom_call.1} parent=1 // pred_fallthru
      _
    // Predicated region
    $region38: #{tpu_custom_call.1} parent=1 // pred_check
      _
    $region39: #{tpu_custom_call.1} parent=1 // pred_check_branch
      %1386 = sbr.rel (0) target = $region41
    $region40: #{tpu_custom_call.1} parent=1 // pred_region
      %1388 = dma.done [#allocation4], 2048
    $region41: #{tpu_custom_call.1} parent=1 // pred_fallthru
      _
    %1389 = vsyncpa [#allocation3], 1
    %1390 = vsyncpa [#allocation6], 1
    %1391 = vsyncpa [#allocation4], 1

</llo_original>
